<compile_context>
chip_gen: v6e
topology: v6e:2x2x1
jax: 0.10.0
libtpu: 0.0.40
codegen_flags: <defaults>
</compile_context>

<pallas_src>
import functools

import jax
import jax.numpy as jnp
from jax import lax
from jax.experimental import pallas as pl
from jax.experimental.pallas import tpu as pltpu


def _round_up(x, m):
    return (x + m - 1) // m * m


def _linear_kernel(x_ref, w_ref, b_ref, o_ref, acc_ref):
    """One (tm, tn) output tile, accumulated over the K grid axis.

    x_ref  : (tm, tk) activation tile
    w_ref  : (tn, tk) weight tile in PyTorch (out, in) layout -- contracted
             last-dim against last-dim, so no transpose anywhere.
    b_ref  : (1, tn)  bias row (index map only depends on the N axis)
    o_ref  : (tm, tn) output tile
    acc_ref: (tm, tn) f32 VMEM accumulator scratch
    """
    k = pl.program_id(2)

    @pl.when(k == 0)
    def _init():
        acc_ref[...] = jnp.zeros_like(acc_ref)

    acc_ref[...] += lax.dot_general(
        x_ref[...], w_ref[...],
        dimension_numbers=(((1,), (1,)), ((), ())),   # x[m,k] . w[n,k] -> (m,n)
        preferred_element_type=jnp.float32)

    @pl.when(k == pl.num_programs(2) - 1)
    def _finalize():
        o_ref[...] = (acc_ref[...] + b_ref[...].astype(jnp.float32)).astype(o_ref.dtype)


def _linear_pallas(x, weight, bias, *, tm, tn, tk):
    M, K = x.shape
    N = weight.shape[0]

    # Clamp tiles so we never pad a dimension past its (8,128)-rounded size.
    tm = min(tm, _round_up(M, 8))
    tn = min(tn, _round_up(N, 128))
    tk = min(tk, _round_up(K, 128))

    Mp, Np, Kp = _round_up(M, tm), _round_up(N, tn), _round_up(K, tk)

    if (Mp, Kp) != (M, K):
        x = jnp.pad(x, ((0, Mp - M), (0, Kp - K)))
    if (Np, Kp) != (N, K):
        weight = jnp.pad(weight, ((0, Np - N), (0, Kp - K)))
    b2 = bias if Np == N else jnp.pad(bias, (0, Np - N))
    b2 = b2.reshape(1, Np)

    grid = (Mp // tm, Np // tn, Kp // tk)

    out = pl.pallas_call(
        _linear_kernel,
        out_shape=jax.ShapeDtypeStruct((Mp, Np), x.dtype),
        grid_spec=pltpu.PrefetchScalarGridSpec(
            num_scalar_prefetch=0,
            grid=grid,
            in_specs=[
                pl.BlockSpec((tm, tk), lambda i, j, k: (i, k)),   # x tile
                pl.BlockSpec((tn, tk), lambda i, j, k: (j, k)),   # W tile (out, in)
                pl.BlockSpec((1, tn), lambda i, j, k: (0, j)),    # bias row, static across K
            ],
            out_specs=pl.BlockSpec((tm, tn), lambda i, j, k: (i, j)),
            scratch_shapes=[pltpu.VMEM((tm, tn), jnp.float32)],
        ),
        compiler_params=pltpu.CompilerParams(
            dimension_semantics=("parallel", "parallel", "arbitrary"),
            vmem_limit_bytes=32 * 1024 * 1024,
        ),
    )(x, weight, b2)

    if (Mp, Np) != (M, N):
        out = out[:M, :N]
    return out


# Below roughly one MXU tile of useful work, the pallas_call launch + DMA
# setup dominates wall-clock; plain fused XLA is strictly faster there.
_MIN_PALLAS_FLOPS = 2 * 128 * 128 * 512


@functools.partial(jax.jit, static_argnames=("tm", "tn", "tk"))
def g_network_forward(x, weight, bias, *, tm=128, tn=256, tk=512):
    """Forward of G_network: x @ weight.T + bias.

    x:      (B, input_size)
    weight: (output_size, input_size) -- PyTorch nn.Linear layout, untransposed
    bias:   (output_size,)
    """
    B, K = x.shape
    N = weight.shape[0]
    flops = 2 * B * K * N
    if flops < _MIN_PALLAS_FLOPS or B < 8 or K < 128 or N < 128:
        # Small / lane-sparse shapes: dispatch to plain XLA (no transpose op;
        # dot_general contracts against the PyTorch layout directly).
        return lax.dot_general(x, weight, (((1,), (1,)), ((), ()))) + bias
    return _linear_pallas(x, weight, bias, tm=tm, tn=tn, tk=tk)


if __name__ == "__main__":
    key = jax.random.PRNGKey(0)
    kx, kw, kb, kx2, kw2, kb2 = jax.random.split(key, 6)

    # ---- Pallas path: MXU/lane-aligned layer sizes ------------------------
    batch, input_size, output_size = 256, 512, 512
    bound = 1.0 / (input_size ** 0.5)
    weight = jax.random.uniform(kw, (output_size, input_size), jnp.float32,
                                minval=-bound, maxval=bound)
    bias = jax.random.uniform(kb, (output_size,), jnp.float32,
                              minval=-bound, maxval=bound)
    x = jax.random.normal(kx, (batch, input_size), jnp.float32)

    out = g_network_forward(x, weight, bias)
    out = jax.block_until_ready(out)

    ref = lax.dot_general(x, weight, (((1,), (1,)), ((), ())),
                          precision=lax.Precision.HIGHEST) + bias
    assert out.shape == (batch, output_size)
    assert jnp.allclose(out, ref, atol=1e-3, rtol=1e-3), \
        float(jnp.max(jnp.abs(out - ref)))

    # ---- Small-shape path: falls back to fused XLA ------------------------
    b_s, in_s, out_s = 8, 32, 64
    bound_s = 1.0 / (in_s ** 0.5)
    w_s = jax.random.uniform(kw2, (out_s, in_s), jnp.float32,
                             minval=-bound_s, maxval=bound_s)
    bi_s = jax.random.uniform(kb2, (out_s,), jnp.float32,
                              minval=-bound_s, maxval=bound_s)
    x_s = jax.random.normal(kx2, (b_s, in_s), jnp.float32)

    out_small = jax.block_until_ready(g_network_forward(x_s, w_s, bi_s))
    ref_small = lax.dot_general(x_s, w_s, (((1,), (1,)), ((), ())),
                                precision=lax.Precision.HIGHEST) + bi_s
    assert out_small.shape == (b_s, out_s)
    assert jnp.allclose(out_small, ref_small, atol=1e-2, rtol=1e-2)

    print("KERNEL_OK")
</pallas_src>

<mosaic_0001>
module attributes {stable_mosaic.version = 11 : i64} {
  func.func @_linear_kernel(%arg0: i32, %arg1: i32, %arg2: i32, %arg3: memref<128x512xf32, #tpu.memory_space<vmem>>, %arg4: memref<256x512xf32, #tpu.memory_space<vmem>>, %arg5: memref<1x256xf32, #tpu.memory_space<vmem>>, %arg6: memref<128x256xf32, #tpu.memory_space<vmem>>, %arg7: memref<128x256xf32, #tpu.memory_space<vmem>>) attributes {dimension_semantics = [#tpu.dimension_semantics<parallel>, #tpu.dimension_semantics<parallel>, #tpu.dimension_semantics<arbitrary>], iteration_bounds = array<i64: 2, 2, 1>, scalar_prefetch = 0 : i64, scratch_operands = 1 : i64, tpu.core_type = #tpu.core_type<tc>, window_params = [{transform_indices = @transform_0, window_bounds = array<i64: 128, 512>}, {transform_indices = @transform_1, window_bounds = array<i64: 256, 512>}, {transform_indices = @transform_2, window_bounds = array<i64: 1, 256>}, {transform_indices = @transform_3, window_bounds = array<i64: 128, 256>}]} {
    %c0_i32 = arith.constant 0 : i32
    %0 = arith.cmpi eq, %arg2, %c0_i32 : i32
    %1 = arith.extui %0 : i1 to i32
    %c0_i32_0 = arith.constant 0 : i32
    %2 = arith.cmpi ne, %1, %c0_i32_0 : i32
    scf.if %2 {
      %cst_10 = arith.constant 0.000000e+00 : f32
      %12 = vector.broadcast %cst_10 : f32 to vector<128x256xf32>
      %c0_11 = arith.constant 0 : index
      %c0_12 = arith.constant 0 : index
      %13 = vector.load %arg7[%c0_11, %c0_12] : memref<128x256xf32, #tpu.memory_space<vmem>>, vector<128x256xf32>
      tpu.vector_store %arg7[%c0_11, %c0_12], %12 {strides = array<i32>} : memref<128x256xf32, #tpu.memory_space<vmem>>, vector<128x256xf32>,
    } else {
    }
    %c0 = arith.constant 0 : index
    %c0_1 = arith.constant 0 : index
    %3 = vector.load %arg7[%c0, %c0_1] : memref<128x256xf32, #tpu.memory_space<vmem>>, vector<128x256xf32>
    %c0_2 = arith.constant 0 : index
    %c0_3 = arith.constant 0 : index
    %4 = vector.load %arg3[%c0_2, %c0_3] : memref<128x512xf32, #tpu.memory_space<vmem>>, vector<128x512xf32>
    %c0_4 = arith.constant 0 : index
    %c0_5 = arith.constant 0 : index
    %5 = vector.load %arg4[%c0_4, %c0_5] : memref<256x512xf32, #tpu.memory_space<vmem>>, vector<256x512xf32>
    %cst = arith.constant dense<0.000000e+00> : vector<128x256xf32>
    %6 = tpu.matmul %4, %5, %cst {dimension_numbers = #tpu.dot_dimension_numbers<[1], [1], [0], [0], [0, 0, 1, 0], [], []>} : vector<128x512xf32>, vector<256x512xf32>, vector<128x256xf32> -> vector<128x256xf32>
    %7 = arith.addf %3, %6 : vector<128x256xf32>
    %c0_6 = arith.constant 0 : index
    %c0_7 = arith.constant 0 : index
    %8 = vector.load %arg7[%c0_6, %c0_7] : memref<128x256xf32, #tpu.memory_space<vmem>>, vector<128x256xf32>
    tpu.vector_store %arg7[%c0_6, %c0_7], %7 {strides = array<i32>} : memref<128x256xf32, #tpu.memory_space<vmem>>, vector<128x256xf32>,
    %c0_i32_8 = arith.constant 0 : i32
    %9 = arith.cmpi eq, %arg2, %c0_i32_8 : i32
    %10 = arith.extui %9 : i1 to i32
    %c0_i32_9 = arith.constant 0 : i32
    %11 = arith.cmpi ne, %10, %c0_i32_9 : i32
    scf.if %11 {
      %c0_10 = arith.constant 0 : index
      %c0_11 = arith.constant 0 : index
      %12 = vector.load %arg7[%c0_10, %c0_11] : memref<128x256xf32, #tpu.memory_space<vmem>>, vector<128x256xf32>
      %c0_12 = arith.constant 0 : index
      %c0_13 = arith.constant 0 : index
      %13 = vector.load %arg5[%c0_12, %c0_13] : memref<1x256xf32, #tpu.memory_space<vmem>>, vector<1x256xf32>
      %14 = vector.broadcast %13 : vector<1x256xf32> to vector<128x256xf32>
      %15 = arith.addf %12, %14 : vector<128x256xf32>
      %c0_14 = arith.constant 0 : index
      %c0_15 = arith.constant 0 : index
      %16 = vector.load %arg6[%c0_14, %c0_15] : memref<128x256xf32, #tpu.memory_space<vmem>>, vector<128x256xf32>
      tpu.vector_store %arg6[%c0_14, %c0_15], %15 {strides = array<i32>} : memref<128x256xf32, #tpu.memory_space<vmem>>, vector<128x256xf32>,
    } else {
    }
    return
  }
  func.func @transform_0(%arg0: i32, %arg1: i32, %arg2: i32) -> (i32, i32) {
    %c0_i32 = arith.constant 0 : i32
    return %arg0, %arg2 : i32, i32
  }
  func.func @transform_1(%arg0: i32, %arg1: i32, %arg2: i32) -> (i32, i32) {
    %c0_i32 = arith.constant 0 : i32
    return %arg1, %arg2 : i32, i32
  }
  func.func @transform_2(%arg0: i32, %arg1: i32, %arg2: i32) -> (i32, i32) {
    %c0_i32 = arith.constant 0 : i32
    %c0_i32_0 = arith.constant 0 : i32
    return %c0_i32, %arg1 : i32, i32
  }
  func.func @transform_3(%arg0: i32, %arg1: i32, %arg2: i32) -> (i32, i32) {
    %c0_i32 = arith.constant 0 : i32
    return %arg0, %arg1 : i32, i32
  }
}

</mosaic_0001>

<llo_original>
// kernel: g_network_forward.1
$region0: #{g_network_forward.1}
  #allocation0 [shape = 'u32[]', space=smem, size = 0x4, offset = 0x4, fixed_abs, tag = 'smem constant byte address 0x4 - core index']
  #allocation1 [shape = 'u32[144,128]{1,0:T(1,128)}', space=vmem, size = 0x12000, scoped, tag = 'internal scratch']
  #allocation2 [shape = 'f32[128,256]{1,0:T(8,128)}', space=vmem, size = 0x20000, scoped, tag = 'scratch operand']
  %s0 = inlined_call_operand.hbm [shape: f32[256,512], index: 0, kind: input, shape index: {}]
  %s1 = inlined_call_operand.hbm [shape: f32[512,512], index: 1, kind: input, shape index: {}]
  %s2 = inlined_call_operand.vmem [shape: f32[1,512], index: 2, kind: input, shape index: {}]
  %s3 = inlined_call_operand.hbm [shape: f32[256,512], index: 3, kind: output, shape index: {}]
  %s4 = sld [smem:[#allocation0]]
  $region61: #{g_network_forward.1} parent=0
    _
  %s6 = ssub.s32 1, %s4
  %s7 = scalar_select 0, %s6, %s4
  $region1: #{g_network_forward.1} parent=0
    #allocation3 [shape = 'u8[524288]{0}', space=vmem, size = 0x80000, scoped, tag = 'input window, operand 0']
    #allocation4 [shape = 's32[2]{0}', space=sflag, size = 0x8, scoped, tag = 'scoped memory for g_network_forward.1']
    #allocation5 [shape = 's32[2]{0}', space=sflag, size = 0x8, scoped, tag = 'scoped memory for g_network_forward.1']
    #allocation6 [shape = 'u8[1048576]{0}', space=vmem, size = 0x100000, scoped, tag = 'input window, operand 1']
    #allocation7 [shape = 's32[2]{0}', space=sflag, size = 0x8, scoped, tag = 'scoped memory for g_network_forward.1']
    #allocation8 [shape = 'u8[262144]{0}', space=vmem, size = 0x40000, scoped, tag = 'output window, operand 0']
    %8 = vsyncpa [#allocation4], 0
    %s9 = scalar_lea.sflag [#allocation4], 1
    %10 = vsyncpa %s9, 0
    %11 = vsyncpa [#allocation7], 0
    %s12 = scalar_lea.sflag [#allocation7], 1
    %13 = vsyncpa %s12, 0
    %14 = vsyncpa [#allocation5], 0
    %s15 = scalar_lea.sflag [#allocation5], 1
    %16 = vsyncpa %s15, 0
    loop: start=0, step=1, limit=6
    $region2: #{g_network_forward.1} parent=1 // loop_pre_header
      _
    $region3: #{g_network_forward.1} parent=1 // loop_header
      %s18 = sphi 0, %s22
      %p19 = scmp.ge.s32.totalorder %s18, 6
      %s25 = sphi 0, %s44
      %s26 = sphi 0, %s40
      %s27 = sphi 0, %s36
      %s28 = sphi 0, %s25
      %s29 = sphi 0, %s26
      %s30 = sphi 0, %s27
      %s31 = sphi 0, %s28
      %s32 = sphi 0, %s29
      %s33 = sphi 0, %s30
      %s49 = sphi 0, %s51
      %s52 = sphi 0, %s49
      %s53 = sphi 0, %s52
      %s69 = sphi 0, %s53
      %s77 = sphi 0, %s79
      %s80 = sphi 0, %s77
      %s81 = sphi 0, %s80
      %s97 = sphi 0, %s81
      %s103 = sphi 0, %s105
      %s106 = sphi 0, %s103
      %s107 = sphi 0, %s106
      %s123 = sphi 0, %s107
      %s131 = sphi 0, %s133
      %s134 = sphi 0, %s131
      %s135 = sphi 0, %s134
      %s151 = sphi 0, %s135
    $region4: #{g_network_forward.1} parent=1 // loop_header_branch
      %21 = sbr.rel (%p19) target = $region8
    $region5: #{g_network_forward.1} parent=1 // loop_body
      %s23 = ssub.s32 %s18, 1
      %s24 = ssub.s32 %s18, 2
      %s34 = sadd.s32 1, %s27
      %p35 = scmp.ge.s32.totalorder %s34, 1
      %s36 = scalar_select %p35, 0, %s34
      %s37 = sadd.s32 1, %s26
      %s38 = scalar_select %p35, %s37, %s26
      %p39 = scmp.ge.s32.totalorder %s38, 2
      %s40 = scalar_select %p39, 0, %s38
      %s41 = sadd.s32 1, %s25
      %s42 = scalar_select %p39, %s41, %s25
      %p43 = scmp.ge.s32.totalorder %s42, 2
      %s44 = scalar_select %p43, 0, %s42
      %s45 = ssub.s32 %s25, %s44
      %s46 = ssub.s32 %s27, %s36
      %s47 = sor.u32 %s45, %s46
      %p48 = scmp.eq.s32.totalorder %s47, 0
      %s50 = sadd.s32 %s49, 1
      %s51 = scalar_select %p48, %s49, %s50
      %p54 = pneg %p48
      %p55 = scmp.eq.s32.totalorder %s18, 3
      %p56 = por %p54, %p55
      %p57 = scmp.ne.s32.totalorder %s49, %s52
      %p58 = scmp.eq.s32.totalorder %s18, 0
      %p59 = por %p57, %p58
      %p60 = scmp.ne.s32.totalorder %s49, %s52
      %p61 = scmp.eq.s32.totalorder %s23, 3
      %p62 = por %p60, %p61
      %p63 = scmp.ne.s32.totalorder %s52, %s53
      %p64 = scmp.eq.s32.totalorder %s23, 0
      %p65 = por %p63, %p64
      %p66 = scmp.ne.s32.totalorder %s52, %s53
      %p67 = scmp.eq.s32.totalorder %s24, 3
      %p68 = por %p66, %p67
      %p70 = scmp.ne.s32.totalorder %s53, %s69
      %p71 = scmp.eq.s32.totalorder %s24, 0
      %p72 = por %p70, %p71
      %s73 = ssub.s32 %s26, %s40
      %s74 = ssub.s32 %s27, %s36
      %s75 = sor.u32 %s73, %s74
      %p76 = scmp.eq.s32.totalorder %s75, 0
      %s78 = sadd.s32 %s77, 1
      %s79 = scalar_select %p76, %s77, %s78
      %p82 = pneg %p76
      %p83 = scmp.eq.s32.totalorder %s18, 3
      %p84 = por %p82, %p83
      %p85 = scmp.ne.s32.totalorder %s77, %s80
      %p86 = scmp.eq.s32.totalorder %s18, 0
      %p87 = por %p85, %p86
      %p88 = scmp.ne.s32.totalorder %s77, %s80
      %p89 = scmp.eq.s32.totalorder %s23, 3
      %p90 = por %p88, %p89
      %p91 = scmp.ne.s32.totalorder %s80, %s81
      %p92 = scmp.eq.s32.totalorder %s23, 0
      %p93 = por %p91, %p92
      %p94 = scmp.ne.s32.totalorder %s80, %s81
      %p95 = scmp.eq.s32.totalorder %s24, 3
      %p96 = por %p94, %p95
      %p98 = scmp.ne.s32.totalorder %s81, %s97
      %p99 = scmp.eq.s32.totalorder %s24, 0
      %p100 = por %p98, %p99
      %s101 = ssub.s32 %s26, %s40
      %p102 = scmp.eq.s32.totalorder %s101, 0
      %s104 = sadd.s32 %s103, 1
      %s105 = scalar_select %p102, %s103, %s104
      %p108 = pneg %p102
      %p109 = scmp.eq.s32.totalorder %s18, 3
      %p110 = por %p108, %p109
      %p111 = scmp.ne.s32.totalorder %s103, %s106
      %p112 = scmp.eq.s32.totalorder %s18, 0
      %p113 = por %p111, %p112
      %p114 = scmp.ne.s32.totalorder %s103, %s106
      %p115 = scmp.eq.s32.totalorder %s23, 3
      %p116 = por %p114, %p115
      %p117 = scmp.ne.s32.totalorder %s106, %s107
      %p118 = scmp.eq.s32.totalorder %s23, 0
      %p119 = por %p117, %p118
      %p120 = scmp.ne.s32.totalorder %s106, %s107
      %p121 = scmp.eq.s32.totalorder %s24, 3
      %p122 = por %p120, %p121
      %p124 = scmp.ne.s32.totalorder %s107, %s123
      %p125 = scmp.eq.s32.totalorder %s24, 0
      %p126 = por %p124, %p125
      %s127 = ssub.s32 %s25, %s44
      %s128 = ssub.s32 %s26, %s40
      %s129 = sor.u32 %s127, %s128
      %p130 = scmp.eq.s32.totalorder %s129, 0
      %s132 = sadd.s32 %s131, 1
      %s133 = scalar_select %p130, %s131, %s132
      %p136 = pneg %p130
      %p137 = scmp.eq.s32.totalorder %s18, 3
      %p138 = por %p136, %p137
      %p139 = scmp.ne.s32.totalorder %s131, %s134
      %p140 = scmp.eq.s32.totalorder %s18, 0
      %p141 = por %p139, %p140
      %p142 = scmp.ne.s32.totalorder %s131, %s134
      %p143 = scmp.eq.s32.totalorder %s23, 3
      %p144 = por %p142, %p143
      %p145 = scmp.ne.s32.totalorder %s134, %s135
      %p146 = scmp.eq.s32.totalorder %s23, 0
      %p147 = por %p145, %p146
      %p148 = scmp.ne.s32.totalorder %s134, %s135
      %p149 = scmp.eq.s32.totalorder %s24, 3
      %p150 = por %p148, %p149
      %p152 = scmp.ne.s32.totalorder %s135, %s151
      %p153 = scmp.eq.s32.totalorder %s24, 0
      %p154 = por %p152, %p153
      %p155 = scmp.le.s32.totalorder 1, %s18
      %p156 = scmp.lt.s32.totalorder %s18, 5
      %p157 = pnand %p155, %p156
      %p158 = pneg %p157
      // Predicated region
      $region9: #{g_network_forward.1} parent=5 // pred_check
        _
      $region10: #{g_network_forward.1} parent=5 // pred_check_branch
        %160 = sbr.rel (%p157) target = $region12
      $region11: #{g_network_forward.1} parent=5 // pred_region
        %s161 = ssub.s32 %s18, 1
      $region12: #{g_network_forward.1} parent=5 // pred_fallthru
        _
      %p162 = scmp.lt.s32.totalorder %s18, 4
      // Predicated region
      $region13: #{g_network_forward.1} parent=5 // pred_check
        %p163 = pneg %p162
      $region14: #{g_network_forward.1} parent=5 // pred_check_branch
        %165 = sbr.rel (%p163) target = $region16
      $region15: #{g_network_forward.1} parent=5 // pred_region
        // Predicated region
        $region17: #{g_network_forward.1} parent=15 // pred_check
          %p166 = pneg %p59
        $region18: #{g_network_forward.1} parent=15 // pred_check_branch
          %168 = sbr.rel (%p166) target = $region20
        $region19: #{g_network_forward.1} parent=15 // pred_region
          %s169 = sand.u32 %s49, 1
          %s170 = scalar_lea.sflag [#allocation4], %s169
          %s171 = sand.u32 %s49, 1
          %s172 = smul.addr %s171, 512
          %s173 = scalar_lea.vmem [#allocation3], %s172
          %s174 = smul.u32 16, %s25
          %s175 = smul.u32 4, %s27
          %s177 = ssub.s32 8192, 8192
          %178 = vsyncadd %s170, %s177
          %s179 = smul.addr %s174, 4
          %s180 = sadd.s32 %s175, %s179
          %s181 = smul.addr %s180, 128
          %s182 = scalar_lea.hbm %s0, %s181
          %s183 = sshll.u32 %s173, 4
          %s184 = int_to_ptr.vmem [resolvable:$true] %s183
          %189 = dma.hbm_to_vmem [thread:$0]  %s182, 8192, %s184, %s170, 512, 512, 32
        $region20: #{g_network_forward.1} parent=15 // pred_fallthru
          _
        // Predicated region
        $region21: #{g_network_forward.1} parent=15 // pred_check
          %p190 = pneg %p87
        $region22: #{g_network_forward.1} parent=15 // pred_check_branch
          %192 = sbr.rel (%p190) target = $region24
        $region23: #{g_network_forward.1} parent=15 // pred_region
          %s193 = sand.u32 %s77, 1
          %s194 = scalar_lea.sflag [#allocation7], %s193
          %s195 = sand.u32 %s77, 1
          %s196 = smul.addr %s195, 1024
          %s197 = scalar_lea.vmem [#allocation6], %s196
          %s198 = smul.u32 32, %s26
          %s199 = smul.u32 4, %s27
          %s201 = ssub.s32 16384, 16384
          %202 = vsyncadd %s194, %s201
          %s203 = smul.addr %s198, 4
          %s204 = sadd.s32 %s199, %s203
          %s205 = smul.addr %s204, 128
          %s206 = scalar_lea.hbm %s1, %s205
          %s207 = sshll.u32 %s197, 4
          %s208 = int_to_ptr.vmem [resolvable:$true] %s207
          %213 = dma.hbm_to_vmem [thread:$0]  %s206, 16384, %s208, %s194, 512, 512, 32
        $region24: #{g_network_forward.1} parent=15 // pred_fallthru
          _
        // Predicated region
        $region25: #{g_network_forward.1} parent=15 // pred_check
          %p214 = pneg %p113
        $region26: #{g_network_forward.1} parent=15 // pred_check_branch
          %216 = sbr.rel (%p214) target = $region28
        $region27: #{g_network_forward.1} parent=15 // pred_region
          %s217 = smul.u32 2, %s26
          %p218 = scmp.lt.s32.totalorder %s217, 3
          %s219 = scalar_select %p218, %s217, 3
          %s220 = scalar_lea.vmem %s2, %s219
          %s221 = smul.u32 2, %s26
        $region28: #{g_network_forward.1} parent=15 // pred_fallthru
          _
      $region16: #{g_network_forward.1} parent=5 // pred_fallthru
        _
      %p222 = scmp.le.s32.totalorder 1, %s18
      %p223 = scmp.lt.s32.totalorder %s18, 5
      %p224 = pnand %p222, %p223
      %p225 = pneg %p224
      // Predicated region
      $region29: #{g_network_forward.1} parent=5 // pred_check
        _
      $region30: #{g_network_forward.1} parent=5 // pred_check_branch
        %227 = sbr.rel (%p224) target = $region32
      $region31: #{g_network_forward.1} parent=5 // pred_region
        %s228 = ssub.s32 %s18, 1
        %s229 = sand.u32 %s52, 1
        %s230 = scalar_lea.sflag [#allocation4], %s229
        %s231 = sand.u32 %s52, 1
        %s232 = smul.addr %s231, 512
        %s233 = scalar_lea.vmem [#allocation3], %s232
        // Predicated region
        $region33: #{g_network_forward.1} parent=31 // pred_check
          %p234 = pneg %p65
        $region34: #{g_network_forward.1} parent=31 // pred_check_branch
          %236 = sbr.rel (%p234) target = $region36
        $region35: #{g_network_forward.1} parent=31 // pred_region
          %237 = dma.done %s230, 8192
        $region36: #{g_network_forward.1} parent=31 // pred_fallthru
          _
        %s238 = sand.u32 %s80, 1
        %s239 = scalar_lea.sflag [#allocation7], %s238
        %s240 = sand.u32 %s80, 1
        %s241 = smul.addr %s240, 1024
        %s242 = scalar_lea.vmem [#allocation6], %s241
        // Predicated region
        $region37: #{g_network_forward.1} parent=31 // pred_check
          %p243 = pneg %p93
        $region38: #{g_network_forward.1} parent=31 // pred_check_branch
          %245 = sbr.rel (%p243) target = $region40
        $region39: #{g_network_forward.1} parent=31 // pred_region
          %246 = dma.done %s239, 16384
        $region40: #{g_network_forward.1} parent=31 // pred_fallthru
          _
        %s247 = sand.u32 %s52, 1
        %s248 = scalar_lea.sflag [#allocation4], %s247
        %s249 = sand.u32 %s52, 1
        %s250 = smul.addr %s249, 512
        %s251 = scalar_lea.vmem [#allocation3], %s250
        %p252 = pneg %p65
        %p253 = pneg %p62
        %s254 = sand.u32 %s80, 1
        %s255 = scalar_lea.sflag [#allocation7], %s254
        %s256 = sand.u32 %s80, 1
        %s257 = smul.addr %s256, 1024
        %s258 = scalar_lea.vmem [#allocation6], %s257
        %p259 = pneg %p93
        %p260 = pneg %p90
        %s261 = smul.u32 2, %s29
        %p262 = scmp.lt.s32.totalorder %s261, 3
        %s263 = scalar_select %p262, %s261, 3
        %s264 = scalar_lea.vmem %s2, %s263
        %p265 = pneg %p119
        %p266 = pneg %p116
        %p267 = pneg %p147
        %p268 = pneg %p144
        %s269 = sand.u32 %s134, 1
        %s270 = scalar_lea.sflag [#allocation5], %s269
        %s271 = sand.u32 %s134, 1
        %s272 = smul.addr %s271, 256
        %s273 = scalar_lea.vmem [#allocation8], %s272
        %s274 = smul.u32 16, %s28
        %s275 = smul.u32 4, %s30
        %s276 = smul.u32 32, %s29
        %s277 = smul.u32 4, %s30
        %s278 = smul.u32 2, %s29
        %p279 = scmp.lt.s32.totalorder %s278, 3
        %s280 = scalar_select %p279, %s278, 3
        %s281 = scalar_lea.vmem %s2, %s280
        %s282 = smul.u32 2, %s29
        %s283 = smul.u32 16, %s28
        %s284 = smul.u32 2, %s29
        %p285 = scmp.eq.s32.totalorder %s30, 0
        // Predicated region
        $region41: #{g_network_forward.1} parent=31 // pred_check
          %p286 = pneg %p285
        $region42: #{g_network_forward.1} parent=31 // pred_check_branch
          %288 = sbr.rel (%p286) target = $region44
        $region43: #{g_network_forward.1} parent=31 // pred_region
          %289 = vst [vmem:[#allocation2] sm:$0xff] 0.0
          %290 = vst [vmem:[#allocation2 + $0x8] sm:$0xff] 0.0
          %291 = vst [vmem:[#allocation2 + $0x10] sm:$0xff] 0.0
          %292 = vst [vmem:[#allocation2 + $0x18] sm:$0xff] 0.0
          %293 = vst [vmem:[#allocation2 + $0x20] sm:$0xff] 0.0
          %294 = vst [vmem:[#allocation2 + $0x28] sm:$0xff] 0.0
          %295 = vst [vmem:[#allocation2 + $0x30] sm:$0xff] 0.0
          %296 = vst [vmem:[#allocation2 + $0x38] sm:$0xff] 0.0
          %297 = vst [vmem:[#allocation2 + $0x40] sm:$0xff] 0.0
          %298 = vst [vmem:[#allocation2 + $0x48] sm:$0xff] 0.0
          %299 = vst [vmem:[#allocation2 + $0x50] sm:$0xff] 0.0
          %300 = vst [vmem:[#allocation2 + $0x58] sm:$0xff] 0.0
          %301 = vst [vmem:[#allocation2 + $0x60] sm:$0xff] 0.0
          %302 = vst [vmem:[#allocation2 + $0x68] sm:$0xff] 0.0
          %303 = vst [vmem:[#allocation2 + $0x70] sm:$0xff] 0.0
          %304 = vst [vmem:[#allocation2 + $0x78] sm:$0xff] 0.0
          %305 = vst [vmem:[#allocation2 + $0x80] sm:$0xff] 0.0
          %306 = vst [vmem:[#allocation2 + $0x88] sm:$0xff] 0.0
          %307 = vst [vmem:[#allocation2 + $0x90] sm:$0xff] 0.0
          %308 = vst [vmem:[#allocation2 + $0x98] sm:$0xff] 0.0
          %309 = vst [vmem:[#allocation2 + $0xa0] sm:$0xff] 0.0
          %310 = vst [vmem:[#allocation2 + $0xa8] sm:$0xff] 0.0
          %311 = vst [vmem:[#allocation2 + $0xb0] sm:$0xff] 0.0
          %312 = vst [vmem:[#allocation2 + $0xb8] sm:$0xff] 0.0
          %313 = vst [vmem:[#allocation2 + $0xc0] sm:$0xff] 0.0
          %314 = vst [vmem:[#allocation2 + $0xc8] sm:$0xff] 0.0
          %315 = vst [vmem:[#allocation2 + $0xd0] sm:$0xff] 0.0
          %316 = vst [vmem:[#allocation2 + $0xd8] sm:$0xff] 0.0
          %317 = vst [vmem:[#allocation2 + $0xe0] sm:$0xff] 0.0
          %318 = vst [vmem:[#allocation2 + $0xe8] sm:$0xff] 0.0
          %319 = vst [vmem:[#allocation2 + $0xf0] sm:$0xff] 0.0
          %320 = vst [vmem:[#allocation2 + $0xf8] sm:$0xff] 0.0
        $region44: #{g_network_forward.1} parent=31 // pred_fallthru
          _
        %v321 = vld [vmem:[#allocation2] sm:$0xff]
        %v322 = vld [vmem:[#allocation2 + $0x8] sm:$0xff]
        %v323 = vld [vmem:[#allocation2 + $0x10] sm:$0xff]
        %v324 = vld [vmem:[#allocation2 + $0x18] sm:$0xff]
        %v325 = vld [vmem:[#allocation2 + $0x20] sm:$0xff]
        %v326 = vld [vmem:[#allocation2 + $0x28] sm:$0xff]
        %v327 = vld [vmem:[#allocation2 + $0x30] sm:$0xff]
        %v328 = vld [vmem:[#allocation2 + $0x38] sm:$0xff]
        %v329 = vld [vmem:[#allocation2 + $0x40] sm:$0xff]
        %v330 = vld [vmem:[#allocation2 + $0x48] sm:$0xff]
        %v331 = vld [vmem:[#allocation2 + $0x50] sm:$0xff]
        %v332 = vld [vmem:[#allocation2 + $0x58] sm:$0xff]
        %v333 = vld [vmem:[#allocation2 + $0x60] sm:$0xff]
        %v334 = vld [vmem:[#allocation2 + $0x68] sm:$0xff]
        %v335 = vld [vmem:[#allocation2 + $0x70] sm:$0xff]
        %v336 = vld [vmem:[#allocation2 + $0x78] sm:$0xff]
        %v337 = vld [vmem:[#allocation2 + $0x80] sm:$0xff]
        %v338 = vld [vmem:[#allocation2 + $0x88] sm:$0xff]
        %v339 = vld [vmem:[#allocation2 + $0x90] sm:$0xff]
        %v340 = vld [vmem:[#allocation2 + $0x98] sm:$0xff]
        %v341 = vld [vmem:[#allocation2 + $0xa0] sm:$0xff]
        %v342 = vld [vmem:[#allocation2 + $0xa8] sm:$0xff]
        %v343 = vld [vmem:[#allocation2 + $0xb0] sm:$0xff]
        %v344 = vld [vmem:[#allocation2 + $0xb8] sm:$0xff]
        %v345 = vld [vmem:[#allocation2 + $0xc0] sm:$0xff]
        %v346 = vld [vmem:[#allocation2 + $0xc8] sm:$0xff]
        %v347 = vld [vmem:[#allocation2 + $0xd0] sm:$0xff]
        %v348 = vld [vmem:[#allocation2 + $0xd8] sm:$0xff]
        %v349 = vld [vmem:[#allocation2 + $0xe0] sm:$0xff]
        %v350 = vld [vmem:[#allocation2 + $0xe8] sm:$0xff]
        %v351 = vld [vmem:[#allocation2 + $0xf0] sm:$0xff]
        %v352 = vld [vmem:[#allocation2 + $0xf8] sm:$0xff]
        %v353 = vld [vmem:[%s233] sm:$0xff]
        %v354 = vld [vmem:[%s233 + $0x8] sm:$0xff]
        %v355 = vld [vmem:[%s233 + $0x10] sm:$0xff]
        %v356 = vld [vmem:[%s233 + $0x18] sm:$0xff]
        %v357 = vld [vmem:[%s233 + $0x20] sm:$0xff]
        %v358 = vld [vmem:[%s233 + $0x28] sm:$0xff]
        %v359 = vld [vmem:[%s233 + $0x30] sm:$0xff]
        %v360 = vld [vmem:[%s233 + $0x38] sm:$0xff]
        %v361 = vld [vmem:[%s233 + $0x40] sm:$0xff]
        %v362 = vld [vmem:[%s233 + $0x48] sm:$0xff]
        %v363 = vld [vmem:[%s233 + $0x50] sm:$0xff]
        %v364 = vld [vmem:[%s233 + $0x58] sm:$0xff]
        %v365 = vld [vmem:[%s233 + $0x60] sm:$0xff]
        %v366 = vld [vmem:[%s233 + $0x68] sm:$0xff]
        %v367 = vld [vmem:[%s233 + $0x70] sm:$0xff]
        %v368 = vld [vmem:[%s233 + $0x78] sm:$0xff]
        %v369 = vld [vmem:[%s233 + $0x80] sm:$0xff]
        %v370 = vld [vmem:[%s233 + $0x88] sm:$0xff]
        %v371 = vld [vmem:[%s233 + $0x90] sm:$0xff]
        %v372 = vld [vmem:[%s233 + $0x98] sm:$0xff]
        %v373 = vld [vmem:[%s233 + $0xa0] sm:$0xff]
        %v374 = vld [vmem:[%s233 + $0xa8] sm:$0xff]
        %v375 = vld [vmem:[%s233 + $0xb0] sm:$0xff]
        %v376 = vld [vmem:[%s233 + $0xb8] sm:$0xff]
        %v377 = vld [vmem:[%s233 + $0xc0] sm:$0xff]
        %v378 = vld [vmem:[%s233 + $0xc8] sm:$0xff]
        %v379 = vld [vmem:[%s233 + $0xd0] sm:$0xff]
        %v380 = vld [vmem:[%s233 + $0xd8] sm:$0xff]
        %v381 = vld [vmem:[%s233 + $0xe0] sm:$0xff]
        %v382 = vld [vmem:[%s233 + $0xe8] sm:$0xff]
        %v383 = vld [vmem:[%s233 + $0xf0] sm:$0xff]
        %v384 = vld [vmem:[%s233 + $0xf8] sm:$0xff]
        %v385 = vld [vmem:[%s233 + $0x100] sm:$0xff]
        %v386 = vld [vmem:[%s233 + $0x108] sm:$0xff]
        %v387 = vld [vmem:[%s233 + $0x110] sm:$0xff]
        %v388 = vld [vmem:[%s233 + $0x118] sm:$0xff]
        %v389 = vld [vmem:[%s233 + $0x120] sm:$0xff]
        %v390 = vld [vmem:[%s233 + $0x128] sm:$0xff]
        %v391 = vld [vmem:[%s233 + $0x130] sm:$0xff]
        %v392 = vld [vmem:[%s233 + $0x138] sm:$0xff]
        %v393 = vld [vmem:[%s233 + $0x140] sm:$0xff]
        %v394 = vld [vmem:[%s233 + $0x148] sm:$0xff]
        %v395 = vld [vmem:[%s233 + $0x150] sm:$0xff]
        %v396 = vld [vmem:[%s233 + $0x158] sm:$0xff]
        %v397 = vld [vmem:[%s233 + $0x160] sm:$0xff]
        %v398 = vld [vmem:[%s233 + $0x168] sm:$0xff]
        %v399 = vld [vmem:[%s233 + $0x170] sm:$0xff]
        %v400 = vld [vmem:[%s233 + $0x178] sm:$0xff]
        %v401 = vld [vmem:[%s233 + $0x180] sm:$0xff]
        %v402 = vld [vmem:[%s233 + $0x188] sm:$0xff]
        %v403 = vld [vmem:[%s233 + $0x190] sm:$0xff]
        %v404 = vld [vmem:[%s233 + $0x198] sm:$0xff]
        %v405 = vld [vmem:[%s233 + $0x1a0] sm:$0xff]
        %v406 = vld [vmem:[%s233 + $0x1a8] sm:$0xff]
        %v407 = vld [vmem:[%s233 + $0x1b0] sm:$0xff]
        %v408 = vld [vmem:[%s233 + $0x1b8] sm:$0xff]
        %v409 = vld [vmem:[%s233 + $0x1c0] sm:$0xff]
        %v410 = vld [vmem:[%s233 + $0x1c8] sm:$0xff]
        %v411 = vld [vmem:[%s233 + $0x1d0] sm:$0xff]
        %v412 = vld [vmem:[%s233 + $0x1d8] sm:$0xff]
        %v413 = vld [vmem:[%s233 + $0x1e0] sm:$0xff]
        %v414 = vld [vmem:[%s233 + $0x1e8] sm:$0xff]
        %v415 = vld [vmem:[%s233 + $0x1f0] sm:$0xff]
        %v416 = vld [vmem:[%s233 + $0x1f8] sm:$0xff]
        %v417 = vld [vmem:[%s242] sm:$0xff]
        %v418 = vld [vmem:[%s242 + $0x8] sm:$0xff]
        %v419 = vld [vmem:[%s242 + $0x10] sm:$0xff]
        %v420 = vld [vmem:[%s242 + $0x18] sm:$0xff]
        %v421 = vld [vmem:[%s242 + $0x20] sm:$0xff]
        %v422 = vld [vmem:[%s242 + $0x28] sm:$0xff]
        %v423 = vld [vmem:[%s242 + $0x30] sm:$0xff]
        %v424 = vld [vmem:[%s242 + $0x38] sm:$0xff]
        %v425 = vld [vmem:[%s242 + $0x40] sm:$0xff]
        %v426 = vld [vmem:[%s242 + $0x48] sm:$0xff]
        %v427 = vld [vmem:[%s242 + $0x50] sm:$0xff]
        %v428 = vld [vmem:[%s242 + $0x58] sm:$0xff]
        %v429 = vld [vmem:[%s242 + $0x60] sm:$0xff]
        %v430 = vld [vmem:[%s242 + $0x68] sm:$0xff]
        %v431 = vld [vmem:[%s242 + $0x70] sm:$0xff]
        %v432 = vld [vmem:[%s242 + $0x78] sm:$0xff]
        %v433 = vld [vmem:[%s242 + $0x80] sm:$0xff]
        %v434 = vld [vmem:[%s242 + $0x88] sm:$0xff]
        %v435 = vld [vmem:[%s242 + $0x90] sm:$0xff]
        %v436 = vld [vmem:[%s242 + $0x98] sm:$0xff]
        %v437 = vld [vmem:[%s242 + $0xa0] sm:$0xff]
        %v438 = vld [vmem:[%s242 + $0xa8] sm:$0xff]
        %v439 = vld [vmem:[%s242 + $0xb0] sm:$0xff]
        %v440 = vld [vmem:[%s242 + $0xb8] sm:$0xff]
        %v441 = vld [vmem:[%s242 + $0xc0] sm:$0xff]
        %v442 = vld [vmem:[%s242 + $0xc8] sm:$0xff]
        %v443 = vld [vmem:[%s242 + $0xd0] sm:$0xff]
        %v444 = vld [vmem:[%s242 + $0xd8] sm:$0xff]
        %v445 = vld [vmem:[%s242 + $0xe0] sm:$0xff]
        %v446 = vld [vmem:[%s242 + $0xe8] sm:$0xff]
        %v447 = vld [vmem:[%s242 + $0xf0] sm:$0xff]
        %v448 = vld [vmem:[%s242 + $0xf8] sm:$0xff]
        %v449 = vld [vmem:[%s242 + $0x100] sm:$0xff]
        %v450 = vld [vmem:[%s242 + $0x108] sm:$0xff]
        %v451 = vld [vmem:[%s242 + $0x110] sm:$0xff]
        %v452 = vld [vmem:[%s242 + $0x118] sm:$0xff]
        %v453 = vld [vmem:[%s242 + $0x120] sm:$0xff]
        %v454 = vld [vmem:[%s242 + $0x128] sm:$0xff]
        %v455 = vld [vmem:[%s242 + $0x130] sm:$0xff]
        %v456 = vld [vmem:[%s242 + $0x138] sm:$0xff]
        %v457 = vld [vmem:[%s242 + $0x140] sm:$0xff]
        %v458 = vld [vmem:[%s242 + $0x148] sm:$0xff]
        %v459 = vld [vmem:[%s242 + $0x150] sm:$0xff]
        %v460 = vld [vmem:[%s242 + $0x158] sm:$0xff]
        %v461 = vld [vmem:[%s242 + $0x160] sm:$0xff]
        %v462 = vld [vmem:[%s242 + $0x168] sm:$0xff]
        %v463 = vld [vmem:[%s242 + $0x170] sm:$0xff]
        %v464 = vld [vmem:[%s242 + $0x178] sm:$0xff]
        %v465 = vld [vmem:[%s242 + $0x180] sm:$0xff]
        %v466 = vld [vmem:[%s242 + $0x188] sm:$0xff]
        %v467 = vld [vmem:[%s242 + $0x190] sm:$0xff]
        %v468 = vld [vmem:[%s242 + $0x198] sm:$0xff]
        %v469 = vld [vmem:[%s242 + $0x1a0] sm:$0xff]
        %v470 = vld [vmem:[%s242 + $0x1a8] sm:$0xff]
        %v471 = vld [vmem:[%s242 + $0x1b0] sm:$0xff]
        %v472 = vld [vmem:[%s242 + $0x1b8] sm:$0xff]
        %v473 = vld [vmem:[%s242 + $0x1c0] sm:$0xff]
        %v474 = vld [vmem:[%s242 + $0x1c8] sm:$0xff]
        %v475 = vld [vmem:[%s242 + $0x1d0] sm:$0xff]
        %v476 = vld [vmem:[%s242 + $0x1d8] sm:$0xff]
        %v477 = vld [vmem:[%s242 + $0x1e0] sm:$0xff]
        %v478 = vld [vmem:[%s242 + $0x1e8] sm:$0xff]
        %v479 = vld [vmem:[%s242 + $0x1f0] sm:$0xff]
        %v480 = vld [vmem:[%s242 + $0x1f8] sm:$0xff]
        %v481 = vld [vmem:[%s242 + $0x200] sm:$0xff]
        %v482 = vld [vmem:[%s242 + $0x208] sm:$0xff]
        %v483 = vld [vmem:[%s242 + $0x210] sm:$0xff]
        %v484 = vld [vmem:[%s242 + $0x218] sm:$0xff]
        %v485 = vld [vmem:[%s242 + $0x220] sm:$0xff]
        %v486 = vld [vmem:[%s242 + $0x228] sm:$0xff]
        %v487 = vld [vmem:[%s242 + $0x230] sm:$0xff]
        %v488 = vld [vmem:[%s242 + $0x238] sm:$0xff]
        %v489 = vld [vmem:[%s242 + $0x240] sm:$0xff]
        %v490 = vld [vmem:[%s242 + $0x248] sm:$0xff]
        %v491 = vld [vmem:[%s242 + $0x250] sm:$0xff]
        %v492 = vld [vmem:[%s242 + $0x258] sm:$0xff]
        %v493 = vld [vmem:[%s242 + $0x260] sm:$0xff]
        %v494 = vld [vmem:[%s242 + $0x268] sm:$0xff]
        %v495 = vld [vmem:[%s242 + $0x270] sm:$0xff]
        %v496 = vld [vmem:[%s242 + $0x278] sm:$0xff]
        %v497 = vld [vmem:[%s242 + $0x280] sm:$0xff]
        %v498 = vld [vmem:[%s242 + $0x288] sm:$0xff]
        %v499 = vld [vmem:[%s242 + $0x290] sm:$0xff]
        %v500 = vld [vmem:[%s242 + $0x298] sm:$0xff]
        %v501 = vld [vmem:[%s242 + $0x2a0] sm:$0xff]
        %v502 = vld [vmem:[%s242 + $0x2a8] sm:$0xff]
        %v503 = vld [vmem:[%s242 + $0x2b0] sm:$0xff]
        %v504 = vld [vmem:[%s242 + $0x2b8] sm:$0xff]
        %v505 = vld [vmem:[%s242 + $0x2c0] sm:$0xff]
        %v506 = vld [vmem:[%s242 + $0x2c8] sm:$0xff]
        %v507 = vld [vmem:[%s242 + $0x2d0] sm:$0xff]
        %v508 = vld [vmem:[%s242 + $0x2d8] sm:$0xff]
        %v509 = vld [vmem:[%s242 + $0x2e0] sm:$0xff]
        %v510 = vld [vmem:[%s242 + $0x2e8] sm:$0xff]
        %v511 = vld [vmem:[%s242 + $0x2f0] sm:$0xff]
        %v512 = vld [vmem:[%s242 + $0x2f8] sm:$0xff]
        %v513 = vld [vmem:[%s242 + $0x300] sm:$0xff]
        %v514 = vld [vmem:[%s242 + $0x308] sm:$0xff]
        %v515 = vld [vmem:[%s242 + $0x310] sm:$0xff]
        %v516 = vld [vmem:[%s242 + $0x318] sm:$0xff]
        %v517 = vld [vmem:[%s242 + $0x320] sm:$0xff]
        %v518 = vld [vmem:[%s242 + $0x328] sm:$0xff]
        %v519 = vld [vmem:[%s242 + $0x330] sm:$0xff]
        %v520 = vld [vmem:[%s242 + $0x338] sm:$0xff]
        %v521 = vld [vmem:[%s242 + $0x340] sm:$0xff]
        %v522 = vld [vmem:[%s242 + $0x348] sm:$0xff]
        %v523 = vld [vmem:[%s242 + $0x350] sm:$0xff]
        %v524 = vld [vmem:[%s242 + $0x358] sm:$0xff]
        %v525 = vld [vmem:[%s242 + $0x360] sm:$0xff]
        %v526 = vld [vmem:[%s242 + $0x368] sm:$0xff]
        %v527 = vld [vmem:[%s242 + $0x370] sm:$0xff]
        %v528 = vld [vmem:[%s242 + $0x378] sm:$0xff]
        %v529 = vld [vmem:[%s242 + $0x380] sm:$0xff]
        %v530 = vld [vmem:[%s242 + $0x388] sm:$0xff]
        %v531 = vld [vmem:[%s242 + $0x390] sm:$0xff]
        %v532 = vld [vmem:[%s242 + $0x398] sm:$0xff]
        %v533 = vld [vmem:[%s242 + $0x3a0] sm:$0xff]
        %v534 = vld [vmem:[%s242 + $0x3a8] sm:$0xff]
        %v535 = vld [vmem:[%s242 + $0x3b0] sm:$0xff]
        %v536 = vld [vmem:[%s242 + $0x3b8] sm:$0xff]
        %v537 = vld [vmem:[%s242 + $0x3c0] sm:$0xff]
        %v538 = vld [vmem:[%s242 + $0x3c8] sm:$0xff]
        %v539 = vld [vmem:[%s242 + $0x3d0] sm:$0xff]
        %v540 = vld [vmem:[%s242 + $0x3d8] sm:$0xff]
        %v541 = vld [vmem:[%s242 + $0x3e0] sm:$0xff]
        %v542 = vld [vmem:[%s242 + $0x3e8] sm:$0xff]
        %v543 = vld [vmem:[%s242 + $0x3f0] sm:$0xff]
        %v544 = vld [vmem:[%s242 + $0x3f8] sm:$0xff]
        %545 = vmatprep.subr.mxu0 %v478
        %546 = vmatpush1.xpose.msra.mxu0 %v477
        %547 = vmatprep.subr.mxu0 %v474
        %548 = vmatpush1.xpose.msra.mxu0 %v473
        %549 = vmatprep.subr.mxu0 %v470
        %550 = vmatpush1.xpose.msra.mxu0 %v469
        %551 = vmatprep.subr.mxu0 %v466
        %552 = vmatpush1.xpose.msra.mxu0 %v465
        %553 = vmatprep.subr.mxu0 %v462
        %554 = vmatpush1.xpose.msra.mxu0 %v461
        %555 = vmatprep.subr.mxu0 %v458
        %556 = vmatpush1.xpose.msra.mxu0 %v457
        %557 = vmatprep.subr.mxu0 %v454
        %558 = vmatpush1.xpose.msra.mxu0 %v453
        %559 = vmatprep.subr.mxu0 %v450
        %560 = vmatpush1.xpose.msra.mxu0 %v449
        %561 = vmatprep.subr.mxu0 %v446
        %562 = vmatpush1.xpose.msra.mxu0 %v445
        %563 = vmatprep.subr.mxu0 %v442
        %564 = vmatpush1.xpose.msra.mxu0 %v441
        %565 = vmatprep.subr.mxu0 %v438
        %566 = vmatpush1.xpose.msra.mxu0 %v437
        %567 = vmatprep.subr.mxu0 %v434
        %568 = vmatpush1.xpose.msra.mxu0 %v433
        %569 = vmatprep.subr.mxu0 %v430
        %570 = vmatpush1.xpose.msra.mxu0 %v429
        %571 = vmatprep.subr.mxu0 %v426
        %572 = vmatpush1.xpose.msra.mxu0 %v425
        %573 = vmatprep.subr.mxu0 %v422
        %574 = vmatpush1.xpose.msra.mxu0 %v421
        %575 = vmatprep.subr.mxu0 %v418
        %576 = vmatpush1.xpose.msra.mxu0 %v417
        %577 = vmatprep.subr.mxu0 %v542
        %578 = vmatpush2.xpose.msra.mxu0 %v541
        %579 = vmatprep.subr.mxu0 %v538
        %580 = vmatpush2.xpose.msra.mxu0 %v537
        %581 = vmatprep.subr.mxu0 %v534
        %582 = vmatpush2.xpose.msra.mxu0 %v533
        %583 = vmatprep.subr.mxu0 %v530
        %584 = vmatpush2.xpose.msra.mxu0 %v529
        %585 = vmatprep.subr.mxu0 %v526
        %586 = vmatpush2.xpose.msra.mxu0 %v525
        %587 = vmatprep.subr.mxu0 %v522
        %588 = vmatpush2.xpose.msra.mxu0 %v521
        %589 = vmatprep.subr.mxu0 %v518
        %590 = vmatpush2.xpose.msra.mxu0 %v517
        %591 = vmatprep.subr.mxu0 %v514
        %592 = vmatpush2.xpose.msra.mxu0 %v513
        %593 = vmatprep.subr.mxu0 %v510
        %594 = vmatpush2.xpose.msra.mxu0 %v509
        %595 = vmatprep.subr.mxu0 %v506
        %596 = vmatpush2.xpose.msra.mxu0 %v505
        %597 = vmatprep.subr.mxu0 %v502
        %598 = vmatpush2.xpose.msra.mxu0 %v501
        %599 = vmatprep.subr.mxu0 %v498
        %600 = vmatpush2.xpose.msra.mxu0 %v497
        %601 = vmatprep.subr.mxu0 %v494
        %602 = vmatpush2.xpose.msra.mxu0 %v493
        %603 = vmatprep.subr.mxu0 %v490
        %604 = vmatpush2.xpose.msra.mxu0 %v489
        %605 = vmatprep.subr.mxu0 %v486
        %606 = vmatpush2.xpose.msra.mxu0 %v485
        %607 = vmatprep.subr.mxu0 %v482
        %608 = vmatpush2.xpose.msra.mxu0 %v481
        %609 = vmatprep.mubr.f32.mxu0 %v354
        %610 = vmatmul.mubr.f32.gmra.mxu0 %v353
        %v611 = vpop.f32.mrf.mxu0
        %v612 = vadd.f32 0.0, %v611
        %v613 = vpop.f32.mrf.mxu0
        %v614 = vadd.f32 0.0, %v613
        %615 = vmatprep.mubr.f32.mxu0 %v358
        %616 = vmatmul.mubr.f32.gmra.mxu0 %v357
        %v617 = vpop.f32.mrf.mxu0
        %v618 = vadd.f32 0.0, %v617
        %v619 = vpop.f32.mrf.mxu0
        %v620 = vadd.f32 0.0, %v619
        %621 = vmatprep.mubr.f32.mxu0 %v362
        %622 = vmatmul.mubr.f32.gmra.mxu0 %v361
        %v623 = vpop.f32.mrf.mxu0
        %v624 = vadd.f32 0.0, %v623
        %v625 = vpop.f32.mrf.mxu0
        %v626 = vadd.f32 0.0, %v625
        %627 = vmatprep.mubr.f32.mxu0 %v366
        %628 = vmatmul.mubr.f32.gmra.mxu0 %v365
        %v629 = vpop.f32.mrf.mxu0
        %v630 = vadd.f32 0.0, %v629
        %v631 = vpop.f32.mrf.mxu0
        %v632 = vadd.f32 0.0, %v631
        %633 = vmatprep.mubr.f32.mxu0 %v370
        %634 = vmatmul.mubr.f32.gmra.mxu0 %v369
        %v635 = vpop.f32.mrf.mxu0
        %v636 = vadd.f32 0.0, %v635
        %v637 = vpop.f32.mrf.mxu0
        %v638 = vadd.f32 0.0, %v637
        %639 = vmatprep.mubr.f32.mxu0 %v374
        %640 = vmatmul.mubr.f32.gmra.mxu0 %v373
        %v641 = vpop.f32.mrf.mxu0
        %v642 = vadd.f32 0.0, %v641
        %v643 = vpop.f32.mrf.mxu0
        %v644 = vadd.f32 0.0, %v643
        %645 = vmatprep.mubr.f32.mxu0 %v378
        %646 = vmatmul.mubr.f32.gmra.mxu0 %v377
        %v647 = vpop.f32.mrf.mxu0
        %v648 = vadd.f32 0.0, %v647
        %v649 = vpop.f32.mrf.mxu0
        %v650 = vadd.f32 0.0, %v649
        %651 = vmatprep.mubr.f32.mxu0 %v382
        %652 = vmatmul.mubr.f32.gmra.mxu0 %v381
        %v653 = vpop.f32.mrf.mxu0
        %v654 = vadd.f32 0.0, %v653
        %v655 = vpop.f32.mrf.mxu0
        %v656 = vadd.f32 0.0, %v655
        %657 = vmatprep.mubr.f32.mxu0 %v386
        %658 = vmatmul.mubr.f32.gmra.mxu0 %v385
        %v659 = vpop.f32.mrf.mxu0
        %v660 = vadd.f32 0.0, %v659
        %v661 = vpop.f32.mrf.mxu0
        %v662 = vadd.f32 0.0, %v661
        %663 = vmatprep.mubr.f32.mxu0 %v390
        %664 = vmatmul.mubr.f32.gmra.mxu0 %v389
        %v665 = vpop.f32.mrf.mxu0
        %v666 = vadd.f32 0.0, %v665
        %v667 = vpop.f32.mrf.mxu0
        %v668 = vadd.f32 0.0, %v667
        %669 = vmatprep.mubr.f32.mxu0 %v394
        %670 = vmatmul.mubr.f32.gmra.mxu0 %v393
        %v671 = vpop.f32.mrf.mxu0
        %v672 = vadd.f32 0.0, %v671
        %v673 = vpop.f32.mrf.mxu0
        %v674 = vadd.f32 0.0, %v673
        %675 = vmatprep.mubr.f32.mxu0 %v398
        %676 = vmatmul.mubr.f32.gmra.mxu0 %v397
        %v677 = vpop.f32.mrf.mxu0
        %v678 = vadd.f32 0.0, %v677
        %v679 = vpop.f32.mrf.mxu0
        %v680 = vadd.f32 0.0, %v679
        %681 = vmatprep.mubr.f32.mxu0 %v402
        %682 = vmatmul.mubr.f32.gmra.mxu0 %v401
        %v683 = vpop.f32.mrf.mxu0
        %v684 = vadd.f32 0.0, %v683
        %v685 = vpop.f32.mrf.mxu0
        %v686 = vadd.f32 0.0, %v685
        %687 = vmatprep.mubr.f32.mxu0 %v406
        %688 = vmatmul.mubr.f32.gmra.mxu0 %v405
        %v689 = vpop.f32.mrf.mxu0
        %v690 = vadd.f32 0.0, %v689
        %v691 = vpop.f32.mrf.mxu0
        %v692 = vadd.f32 0.0, %v691
        %693 = vmatprep.mubr.f32.mxu0 %v410
        %694 = vmatmul.mubr.f32.gmra.mxu0 %v409
        %v695 = vpop.f32.mrf.mxu0
        %v696 = vadd.f32 0.0, %v695
        %v697 = vpop.f32.mrf.mxu0
        %v698 = vadd.f32 0.0, %v697
        %699 = vmatprep.mubr.f32.mxu0 %v414
        %700 = vmatmul.mubr.f32.gmra.mxu0 %v413
        %v701 = vpop.f32.mrf.mxu0
        %v702 = vadd.f32 0.0, %v701
        %v703 = vpop.f32.mrf.mxu0
        %v704 = vadd.f32 0.0, %v703
        %705 = vdwg.mxu0
        %706 = vmatprep.subr.mxu0 %v480
        %707 = vmatpush1.xpose.msra.mxu0 %v479
        %708 = vmatprep.subr.mxu0 %v476
        %709 = vmatpush1.xpose.msra.mxu0 %v475
        %710 = vmatprep.subr.mxu0 %v472
        %711 = vmatpush1.xpose.msra.mxu0 %v471
        %712 = vmatprep.subr.mxu0 %v468
        %713 = vmatpush1.xpose.msra.mxu0 %v467
        %714 = vmatprep.subr.mxu0 %v464
        %715 = vmatpush1.xpose.msra.mxu0 %v463
        %716 = vmatprep.subr.mxu0 %v460
        %717 = vmatpush1.xpose.msra.mxu0 %v459
        %718 = vmatprep.subr.mxu0 %v456
        %719 = vmatpush1.xpose.msra.mxu0 %v455
        %720 = vmatprep.subr.mxu0 %v452
        %721 = vmatpush1.xpose.msra.mxu0 %v451
        %722 = vmatprep.subr.mxu0 %v448
        %723 = vmatpush1.xpose.msra.mxu0 %v447
        %724 = vmatprep.subr.mxu0 %v444
        %725 = vmatpush1.xpose.msra.mxu0 %v443
        %726 = vmatprep.subr.mxu0 %v440
        %727 = vmatpush1.xpose.msra.mxu0 %v439
        %728 = vmatprep.subr.mxu0 %v436
        %729 = vmatpush1.xpose.msra.mxu0 %v435
        %730 = vmatprep.subr.mxu0 %v432
        %731 = vmatpush1.xpose.msra.mxu0 %v431
        %732 = vmatprep.subr.mxu0 %v428
        %733 = vmatpush1.xpose.msra.mxu0 %v427
        %734 = vmatprep.subr.mxu0 %v424
        %735 = vmatpush1.xpose.msra.mxu0 %v423
        %736 = vmatprep.subr.mxu0 %v420
        %737 = vmatpush1.xpose.msra.mxu0 %v419
        %738 = vmatprep.subr.mxu0 %v544
        %739 = vmatpush2.xpose.msra.mxu0 %v543
        %740 = vmatprep.subr.mxu0 %v540
        %741 = vmatpush2.xpose.msra.mxu0 %v539
        %742 = vmatprep.subr.mxu0 %v536
        %743 = vmatpush2.xpose.msra.mxu0 %v535
        %744 = vmatprep.subr.mxu0 %v532
        %745 = vmatpush2.xpose.msra.mxu0 %v531
        %746 = vmatprep.subr.mxu0 %v528
        %747 = vmatpush2.xpose.msra.mxu0 %v527
        %748 = vmatprep.subr.mxu0 %v524
        %749 = vmatpush2.xpose.msra.mxu0 %v523
        %750 = vmatprep.subr.mxu0 %v520
        %751 = vmatpush2.xpose.msra.mxu0 %v519
        %752 = vmatprep.subr.mxu0 %v516
        %753 = vmatpush2.xpose.msra.mxu0 %v515
        %754 = vmatprep.subr.mxu0 %v512
        %755 = vmatpush2.xpose.msra.mxu0 %v511
        %756 = vmatprep.subr.mxu0 %v508
        %757 = vmatpush2.xpose.msra.mxu0 %v507
        %758 = vmatprep.subr.mxu0 %v504
        %759 = vmatpush2.xpose.msra.mxu0 %v503
        %760 = vmatprep.subr.mxu0 %v500
        %761 = vmatpush2.xpose.msra.mxu0 %v499
        %762 = vmatprep.subr.mxu0 %v496
        %763 = vmatpush2.xpose.msra.mxu0 %v495
        %764 = vmatprep.subr.mxu0 %v492
        %765 = vmatpush2.xpose.msra.mxu0 %v491
        %766 = vmatprep.subr.mxu0 %v488
        %767 = vmatpush2.xpose.msra.mxu0 %v487
        %768 = vmatprep.subr.mxu0 %v484
        %769 = vmatpush2.xpose.msra.mxu0 %v483
        %770 = vmatprep.mubr.f32.mxu0 %v356
        %771 = vmatmul.mubr.f32.gmra.mxu0 %v355
        %v772 = vpop.f32.mrf.mxu0
        %v773 = vadd.f32 %v612, %v772
        %v774 = vpop.f32.mrf.mxu0
        %v775 = vadd.f32 %v614, %v774
        %776 = vmatprep.mubr.f32.mxu0 %v360
        %777 = vmatmul.mubr.f32.gmra.mxu0 %v359
        %v778 = vpop.f32.mrf.mxu0
        %v779 = vadd.f32 %v618, %v778
        %v780 = vpop.f32.mrf.mxu0
        %v781 = vadd.f32 %v620, %v780
        %782 = vmatprep.mubr.f32.mxu0 %v364
        %783 = vmatmul.mubr.f32.gmra.mxu0 %v363
        %v784 = vpop.f32.mrf.mxu0
        %v785 = vadd.f32 %v624, %v784
        %v786 = vpop.f32.mrf.mxu0
        %v787 = vadd.f32 %v626, %v786
        %788 = vmatprep.mubr.f32.mxu0 %v368
        %789 = vmatmul.mubr.f32.gmra.mxu0 %v367
        %v790 = vpop.f32.mrf.mxu0
        %v791 = vadd.f32 %v630, %v790
        %v792 = vpop.f32.mrf.mxu0
        %v793 = vadd.f32 %v632, %v792
        %794 = vmatprep.mubr.f32.mxu0 %v372
        %795 = vmatmul.mubr.f32.gmra.mxu0 %v371
        %v796 = vpop.f32.mrf.mxu0
        %v797 = vadd.f32 %v636, %v796
        %v798 = vpop.f32.mrf.mxu0
        %v799 = vadd.f32 %v638, %v798
        %800 = vmatprep.mubr.f32.mxu0 %v376
        %801 = vmatmul.mubr.f32.gmra.mxu0 %v375
        %v802 = vpop.f32.mrf.mxu0
        %v803 = vadd.f32 %v642, %v802
        %v804 = vpop.f32.mrf.mxu0
        %v805 = vadd.f32 %v644, %v804
        %806 = vmatprep.mubr.f32.mxu0 %v380
        %807 = vmatmul.mubr.f32.gmra.mxu0 %v379
        %v808 = vpop.f32.mrf.mxu0
        %v809 = vadd.f32 %v648, %v808
        %v810 = vpop.f32.mrf.mxu0
        %v811 = vadd.f32 %v650, %v810
        %812 = vmatprep.mubr.f32.mxu0 %v384
        %813 = vmatmul.mubr.f32.gmra.mxu0 %v383
        %v814 = vpop.f32.mrf.mxu0
        %v815 = vadd.f32 %v654, %v814
        %v816 = vpop.f32.mrf.mxu0
        %v817 = vadd.f32 %v656, %v816
        %818 = vmatprep.mubr.f32.mxu0 %v388
        %819 = vmatmul.mubr.f32.gmra.mxu0 %v387
        %v820 = vpop.f32.mrf.mxu0
        %v821 = vadd.f32 %v660, %v820
        %v822 = vpop.f32.mrf.mxu0
        %v823 = vadd.f32 %v662, %v822
        %824 = vmatprep.mubr.f32.mxu0 %v392
        %825 = vmatmul.mubr.f32.gmra.mxu0 %v391
        %v826 = vpop.f32.mrf.mxu0
        %v827 = vadd.f32 %v666, %v826
        %v828 = vpop.f32.mrf.mxu0
        %v829 = vadd.f32 %v668, %v828
        %830 = vmatprep.mubr.f32.mxu0 %v396
        %831 = vmatmul.mubr.f32.gmra.mxu0 %v395
        %v832 = vpop.f32.mrf.mxu0
        %v833 = vadd.f32 %v672, %v832
        %v834 = vpop.f32.mrf.mxu0
        %v835 = vadd.f32 %v674, %v834
        %836 = vmatprep.mubr.f32.mxu0 %v400
        %837 = vmatmul.mubr.f32.gmra.mxu0 %v399
        %v838 = vpop.f32.mrf.mxu0
        %v839 = vadd.f32 %v678, %v838
        %v840 = vpop.f32.mrf.mxu0
        %v841 = vadd.f32 %v680, %v840
        %842 = vmatprep.mubr.f32.mxu0 %v404
        %843 = vmatmul.mubr.f32.gmra.mxu0 %v403
        %v844 = vpop.f32.mrf.mxu0
        %v845 = vadd.f32 %v684, %v844
        %v846 = vpop.f32.mrf.mxu0
        %v847 = vadd.f32 %v686, %v846
        %848 = vmatprep.mubr.f32.mxu0 %v408
        %849 = vmatmul.mubr.f32.gmra.mxu0 %v407
        %v850 = vpop.f32.mrf.mxu0
        %v851 = vadd.f32 %v690, %v850
        %v852 = vpop.f32.mrf.mxu0
        %v853 = vadd.f32 %v692, %v852
        %854 = vmatprep.mubr.f32.mxu0 %v412
        %855 = vmatmul.mubr.f32.gmra.mxu0 %v411
        %v856 = vpop.f32.mrf.mxu0
        %v857 = vadd.f32 %v696, %v856
        %v858 = vpop.f32.mrf.mxu0
        %v859 = vadd.f32 %v698, %v858
        %860 = vmatprep.mubr.f32.mxu0 %v416
        %861 = vmatmul.mubr.f32.gmra.mxu0 %v415
        %v862 = vpop.f32.mrf.mxu0
        %v863 = vadd.f32 %v702, %v862
        %v864 = vpop.f32.mrf.mxu0
        %v865 = vadd.f32 %v704, %v864
        %866 = vdwg.mxu0
        %v867 = vadd.f32 %v321, %v773
        %v868 = vadd.f32 %v322, %v775
        %v869 = vadd.f32 %v323, %v779
        %v870 = vadd.f32 %v324, %v781
        %v871 = vadd.f32 %v325, %v785
        %v872 = vadd.f32 %v326, %v787
        %v873 = vadd.f32 %v327, %v791
        %v874 = vadd.f32 %v328, %v793
        %v875 = vadd.f32 %v329, %v797
        %v876 = vadd.f32 %v330, %v799
        %v877 = vadd.f32 %v331, %v803
        %v878 = vadd.f32 %v332, %v805
        %v879 = vadd.f32 %v333, %v809
        %v880 = vadd.f32 %v334, %v811
        %v881 = vadd.f32 %v335, %v815
        %v882 = vadd.f32 %v336, %v817
        %v883 = vadd.f32 %v337, %v821
        %v884 = vadd.f32 %v338, %v823
        %v885 = vadd.f32 %v339, %v827
        %v886 = vadd.f32 %v340, %v829
        %v887 = vadd.f32 %v341, %v833
        %v888 = vadd.f32 %v342, %v835
        %v889 = vadd.f32 %v343, %v839
        %v890 = vadd.f32 %v344, %v841
        %v891 = vadd.f32 %v345, %v845
        %v892 = vadd.f32 %v346, %v847
        %v893 = vadd.f32 %v347, %v851
        %v894 = vadd.f32 %v348, %v853
        %v895 = vadd.f32 %v349, %v857
        %v896 = vadd.f32 %v350, %v859
        %v897 = vadd.f32 %v351, %v863
        %v898 = vadd.f32 %v352, %v865
        %899 = vst [vmem:[#allocation2] sm:$0xff] %v867
        %900 = vst [vmem:[#allocation2 + $0x8] sm:$0xff] %v868
        %901 = vst [vmem:[#allocation2 + $0x10] sm:$0xff] %v869
        %902 = vst [vmem:[#allocation2 + $0x18] sm:$0xff] %v870
        %903 = vst [vmem:[#allocation2 + $0x20] sm:$0xff] %v871
        %904 = vst [vmem:[#allocation2 + $0x28] sm:$0xff] %v872
        %905 = vst [vmem:[#allocation2 + $0x30] sm:$0xff] %v873
        %906 = vst [vmem:[#allocation2 + $0x38] sm:$0xff] %v874
        %907 = vst [vmem:[#allocation2 + $0x40] sm:$0xff] %v875
        %908 = vst [vmem:[#allocation2 + $0x48] sm:$0xff] %v876
        %909 = vst [vmem:[#allocation2 + $0x50] sm:$0xff] %v877
        %910 = vst [vmem:[#allocation2 + $0x58] sm:$0xff] %v878
        %911 = vst [vmem:[#allocation2 + $0x60] sm:$0xff] %v879
        %912 = vst [vmem:[#allocation2 + $0x68] sm:$0xff] %v880
        %913 = vst [vmem:[#allocation2 + $0x70] sm:$0xff] %v881
        %914 = vst [vmem:[#allocation2 + $0x78] sm:$0xff] %v882
        %915 = vst [vmem:[#allocation2 + $0x80] sm:$0xff] %v883
        %916 = vst [vmem:[#allocation2 + $0x88] sm:$0xff] %v884
        %917 = vst [vmem:[#allocation2 + $0x90] sm:$0xff] %v885
        %918 = vst [vmem:[#allocation2 + $0x98] sm:$0xff] %v886
        %919 = vst [vmem:[#allocation2 + $0xa0] sm:$0xff] %v887
        %920 = vst [vmem:[#allocation2 + $0xa8] sm:$0xff] %v888
        %921 = vst [vmem:[#allocation2 + $0xb0] sm:$0xff] %v889
        %922 = vst [vmem:[#allocation2 + $0xb8] sm:$0xff] %v890
        %923 = vst [vmem:[#allocation2 + $0xc0] sm:$0xff] %v891
        %924 = vst [vmem:[#allocation2 + $0xc8] sm:$0xff] %v892
        %925 = vst [vmem:[#allocation2 + $0xd0] sm:$0xff] %v893
        %926 = vst [vmem:[#allocation2 + $0xd8] sm:$0xff] %v894
        %927 = vst [vmem:[#allocation2 + $0xe0] sm:$0xff] %v895
        %928 = vst [vmem:[#allocation2 + $0xe8] sm:$0xff] %v896
        %929 = vst [vmem:[#allocation2 + $0xf0] sm:$0xff] %v897
        %930 = vst [vmem:[#allocation2 + $0xf8] sm:$0xff] %v898
        // Predicated region
        $region45: #{g_network_forward.1} parent=31 // pred_check
          %p931 = pneg %p285
        $region46: #{g_network_forward.1} parent=31 // pred_check_branch
          %933 = sbr.rel (%p931) target = $region48
        $region47: #{g_network_forward.1} parent=31 // pred_region
          %v934 = vld [vmem:[#allocation2] sm:$0xff]
          %v935 = vld [vmem:[#allocation2 + $0x8] sm:$0xff]
          %v936 = vld [vmem:[#allocation2 + $0x10] sm:$0xff]
          %v937 = vld [vmem:[#allocation2 + $0x18] sm:$0xff]
          %v938 = vld [vmem:[#allocation2 + $0x20] sm:$0xff]
          %v939 = vld [vmem:[#allocation2 + $0x28] sm:$0xff]
          %v940 = vld [vmem:[#allocation2 + $0x30] sm:$0xff]
          %v941 = vld [vmem:[#allocation2 + $0x38] sm:$0xff]
          %v942 = vld [vmem:[#allocation2 + $0x40] sm:$0xff]
          %v943 = vld [vmem:[#allocation2 + $0x48] sm:$0xff]
          %v944 = vld [vmem:[#allocation2 + $0x50] sm:$0xff]
          %v945 = vld [vmem:[#allocation2 + $0x58] sm:$0xff]
          %v946 = vld [vmem:[#allocation2 + $0x60] sm:$0xff]
          %v947 = vld [vmem:[#allocation2 + $0x68] sm:$0xff]
          %v948 = vld [vmem:[#allocation2 + $0x70] sm:$0xff]
          %v949 = vld [vmem:[#allocation2 + $0x78] sm:$0xff]
          %v950 = vld [vmem:[#allocation2 + $0x80] sm:$0xff]
          %v951 = vld [vmem:[#allocation2 + $0x88] sm:$0xff]
          %v952 = vld [vmem:[#allocation2 + $0x90] sm:$0xff]
          %v953 = vld [vmem:[#allocation2 + $0x98] sm:$0xff]
          %v954 = vld [vmem:[#allocation2 + $0xa0] sm:$0xff]
          %v955 = vld [vmem:[#allocation2 + $0xa8] sm:$0xff]
          %v956 = vld [vmem:[#allocation2 + $0xb0] sm:$0xff]
          %v957 = vld [vmem:[#allocation2 + $0xb8] sm:$0xff]
          %v958 = vld [vmem:[#allocation2 + $0xc0] sm:$0xff]
          %v959 = vld [vmem:[#allocation2 + $0xc8] sm:$0xff]
          %v960 = vld [vmem:[#allocation2 + $0xd0] sm:$0xff]
          %v961 = vld [vmem:[#allocation2 + $0xd8] sm:$0xff]
          %v962 = vld [vmem:[#allocation2 + $0xe0] sm:$0xff]
          %v963 = vld [vmem:[#allocation2 + $0xe8] sm:$0xff]
          %v964 = vld [vmem:[#allocation2 + $0xf0] sm:$0xff]
          %v965 = vld [vmem:[#allocation2 + $0xf8] sm:$0xff]
          %v966 = vld [vmem:[%s281] sm:$0x3]
          %v968 = vlaneseq
          %v969 = vshrl.u32 %v968, 7
          %v970 = vsub.s32 0, %v969
          %v971 = vrot.slane %v966, %v970
          %v972 = vlaneseq
          %v973 = vshrl.u32 %v972, 7
          %v974 = vsub.s32 1, %v973
          %v975 = vrot.slane %v966, %v974
          %v978 = vadd.f32 %v934, %v971
          %v979 = vadd.f32 %v935, %v975
          %v980 = vadd.f32 %v936, %v971
          %v981 = vadd.f32 %v937, %v975
          %v982 = vadd.f32 %v938, %v971
          %v983 = vadd.f32 %v939, %v975
          %v984 = vadd.f32 %v940, %v971
          %v985 = vadd.f32 %v941, %v975
          %v986 = vadd.f32 %v942, %v971
          %v987 = vadd.f32 %v943, %v975
          %v988 = vadd.f32 %v944, %v971
          %v989 = vadd.f32 %v945, %v975
          %v990 = vadd.f32 %v946, %v971
          %v991 = vadd.f32 %v947, %v975
          %v992 = vadd.f32 %v948, %v971
          %v993 = vadd.f32 %v949, %v975
          %v994 = vadd.f32 %v950, %v971
          %v995 = vadd.f32 %v951, %v975
          %v996 = vadd.f32 %v952, %v971
          %v997 = vadd.f32 %v953, %v975
          %v998 = vadd.f32 %v954, %v971
          %v999 = vadd.f32 %v955, %v975
          %v1000 = vadd.f32 %v956, %v971
          %v1001 = vadd.f32 %v957, %v975
          %v1002 = vadd.f32 %v958, %v971
          %v1003 = vadd.f32 %v959, %v975
          %v1004 = vadd.f32 %v960, %v971
          %v1005 = vadd.f32 %v961, %v975
          %v1006 = vadd.f32 %v962, %v971
          %v1007 = vadd.f32 %v963, %v975
          %v1008 = vadd.f32 %v964, %v971
          %v1009 = vadd.f32 %v965, %v975
          %1010 = vst [vmem:[%s273] sm:$0xff] %v978
          %1011 = vst [vmem:[%s273 + $0x8] sm:$0xff] %v979
          %1012 = vst [vmem:[%s273 + $0x10] sm:$0xff] %v980
          %1013 = vst [vmem:[%s273 + $0x18] sm:$0xff] %v981
          %1014 = vst [vmem:[%s273 + $0x20] sm:$0xff] %v982
          %1015 = vst [vmem:[%s273 + $0x28] sm:$0xff] %v983
          %1016 = vst [vmem:[%s273 + $0x30] sm:$0xff] %v984
          %1017 = vst [vmem:[%s273 + $0x38] sm:$0xff] %v985
          %1018 = vst [vmem:[%s273 + $0x40] sm:$0xff] %v986
          %1019 = vst [vmem:[%s273 + $0x48] sm:$0xff] %v987
          %1020 = vst [vmem:[%s273 + $0x50] sm:$0xff] %v988
          %1021 = vst [vmem:[%s273 + $0x58] sm:$0xff] %v989
          %1022 = vst [vmem:[%s273 + $0x60] sm:$0xff] %v990
          %1023 = vst [vmem:[%s273 + $0x68] sm:$0xff] %v991
          %1024 = vst [vmem:[%s273 + $0x70] sm:$0xff] %v992
          %1025 = vst [vmem:[%s273 + $0x78] sm:$0xff] %v993
          %1026 = vst [vmem:[%s273 + $0x80] sm:$0xff] %v994
          %1027 = vst [vmem:[%s273 + $0x88] sm:$0xff] %v995
          %1028 = vst [vmem:[%s273 + $0x90] sm:$0xff] %v996
          %1029 = vst [vmem:[%s273 + $0x98] sm:$0xff] %v997
          %1030 = vst [vmem:[%s273 + $0xa0] sm:$0xff] %v998
          %1031 = vst [vmem:[%s273 + $0xa8] sm:$0xff] %v999
          %1032 = vst [vmem:[%s273 + $0xb0] sm:$0xff] %v1000
          %1033 = vst [vmem:[%s273 + $0xb8] sm:$0xff] %v1001
          %1034 = vst [vmem:[%s273 + $0xc0] sm:$0xff] %v1002
          %1035 = vst [vmem:[%s273 + $0xc8] sm:$0xff] %v1003
          %1036 = vst [vmem:[%s273 + $0xd0] sm:$0xff] %v1004
          %1037 = vst [vmem:[%s273 + $0xd8] sm:$0xff] %v1005
          %1038 = vst [vmem:[%s273 + $0xe0] sm:$0xff] %v1006
          %1039 = vst [vmem:[%s273 + $0xe8] sm:$0xff] %v1007
          %1040 = vst [vmem:[%s273 + $0xf0] sm:$0xff] %v1008
          %1041 = vst [vmem:[%s273 + $0xf8] sm:$0xff] %v1009
        $region48: #{g_network_forward.1} parent=31 // pred_fallthru
          _
        %s1042 = sand.u32 %s134, 1
        %s1043 = scalar_lea.sflag [#allocation5], %s1042
        %s1044 = sand.u32 %s134, 1
        %s1045 = smul.addr %s1044, 256
        %s1046 = scalar_lea.vmem [#allocation8], %s1045
        // Predicated region
        $region49: #{g_network_forward.1} parent=31 // pred_check
          %p1047 = pneg %p144
        $region50: #{g_network_forward.1} parent=31 // pred_check_branch
          %1049 = sbr.rel (%p1047) target = $region52
        $region51: #{g_network_forward.1} parent=31 // pred_region
          %s1050 = smul.u32 16, %s28
          %s1051 = smul.u32 2, %s29
          %s1053 = ssub.s32 4096, 4096
          %1054 = vsyncadd %s1043, %s1053
          %s1055 = smul.addr %s1050, 4
          %s1056 = sadd.s32 %s1051, %s1055
          %s1057 = smul.addr %s1056, 128
          %s1058 = scalar_lea.hbm %s3, %s1057
          %s1059 = sshll.u32 %s1046, 4
          %s1060 = int_to_ptr.vmem [resolvable:$true] %s1059
          %1065 = dma.vmem_to_hbm [thread:$0]  %s1060, 4096, %s1058, %s1043, 256, 512, 16
        $region52: #{g_network_forward.1} parent=31 // pred_fallthru
          _
      $region32: #{g_network_forward.1} parent=5 // pred_fallthru
        _
      %p1066 = scmp.le.s32.totalorder 2, %s18
      // Predicated region
      $region53: #{g_network_forward.1} parent=5 // pred_check
        %p1067 = pneg %p1066
      $region54: #{g_network_forward.1} parent=5 // pred_check_branch
        %1069 = sbr.rel (%p1067) target = $region56
      $region55: #{g_network_forward.1} parent=5 // pred_region
        %s1070 = ssub.s32 %s18, 2
        // Predicated region
        $region57: #{g_network_forward.1} parent=55 // pred_check
          %p1071 = pneg %p150
        $region58: #{g_network_forward.1} parent=55 // pred_check_branch
          %1073 = sbr.rel (%p1071) target = $region60
        $region59: #{g_network_forward.1} parent=55 // pred_region
          %s1074 = sand.u32 %s135, 1
          %s1075 = scalar_lea.sflag [#allocation5], %s1074
          %s1076 = sand.u32 %s135, 1
          %s1077 = smul.addr %s1076, 256
          %s1078 = scalar_lea.vmem [#allocation8], %s1077
          %1079 = dma.done %s1075, 4096
        $region60: #{g_network_forward.1} parent=55 // pred_fallthru
          _
      $region56: #{g_network_forward.1} parent=5 // pred_fallthru
        _
    $region6: #{g_network_forward.1} parent=1 // loop_footer
      %s22 = sadd.s32 1, %s18
    $region7: #{g_network_forward.1} parent=1 // loop_footer_branch
      %17 = sbr.rel target = $region3
    $region8: #{g_network_forward.1} parent=1 // loop_exit
      _
    %1080 = vsyncpa [#allocation4], 1
    %s1081 = scalar_lea.sflag [#allocation4], 1
    %1082 = vsyncpa %s1081, 1
    %1083 = vsyncpa [#allocation7], 1
    %s1084 = scalar_lea.sflag [#allocation7], 1
    %1085 = vsyncpa %s1084, 1
    %1086 = vsyncpa [#allocation5], 1
    %s1087 = scalar_lea.sflag [#allocation5], 1
    %1088 = vsyncpa %s1087, 1

</llo_original>
